<compile_context>
chip_gen: v6e
topology: v6e:2x2x1
jax: 0.10.0
libtpu: 0.0.40
codegen_flags: <defaults>
</compile_context>

<pallas_src>
import math

import jax
import jax.numpy as jnp
import numpy as np
from jax.experimental import pallas as pl
from jax.experimental.pallas import tpu as pltpu


def _round_up(x, m):
    return (x + m - 1) // m * m


def _pe1d_kernel(tab_ref, out_ref):
    x_tile, c = out_ref.shape
    tab = tab_ref[...]                        # (1, 2, C) float32
    freq = tab[:, 0, :]                       # (1, C): inv_freq[c // 2]
    phase = tab[:, 1, :]                      # (1, C): tile base phase + parity*pi/2
    pos = jax.lax.broadcasted_iota(jnp.int32, (x_tile, c), 0).astype(jnp.float32)
    # channel c even -> sin(pos_global * inv_freq[c//2]); odd -> cos(...)
    out_ref[...] = jnp.sin(pos * freq + phase).astype(out_ref.dtype)


def positional_encoding_1d(x, org_channels):
    """Pallas equivalent of PositionalEncoding1D(org_channels)(x)."""
    if x.ndim != 3:
        raise RuntimeError("The input tensor has to be 3d!")
    batch, x_len, orig_ch = x.shape
    out_dtype = x.dtype

    channels = int(np.ceil(org_channels / 2) * 2)   # even; defines frequencies
    if orig_ch > channels:
        raise ValueError("input last dim larger than encoder channels")

    itemsize = jnp.dtype(out_dtype).itemsize
    sub = 8 if itemsize >= 4 else 16

    # --- X tiling: big tiles (bandwidth-bound), VMEM-budgeted, >=2 blocks when
    # possible so the "parallel" axis can be sharded across TensorCores.
    if x_len <= sub:
        x_tile = x_len                                  # single full-dim block
    else:
        row_bytes = max(orig_ch, 1) * itemsize
        rows_budget = max(sub, ((6 << 20) // row_bytes) // sub * sub)
        x_tile = min(2048, rows_budget, _round_up(x_len, sub))
        if pl.cdiv(x_len, x_tile) < 2:
            x_tile = _round_up((x_len + 1) // 2, sub)
    num_tiles = pl.cdiv(x_len, x_tile)

    # --- Host-side table, float64 math (mirrors the torch f64 path):
    #   tab[xi, 0, c] = inv_freq[c // 2]
    #   tab[xi, 1, c] = fmod(x_start(xi) * inv_freq[c//2], 2*pi) + (c % 2) * pi/2
    inv32 = 1.0 / (np.float32(10000.0) **
                   (np.arange(0, channels, 2, dtype=np.float32) / np.float32(channels)))
    inv_freq = inv32.astype(np.float64)
    ch = np.arange(orig_ch)
    freq_c = inv_freq[ch // 2]                                      # (C,) f64
    parity = np.where(ch % 2 == 1, math.pi / 2.0, 0.0)              # (C,) f64
    x_starts = np.arange(num_tiles, dtype=np.float64) * float(x_tile)
    base = np.mod(x_starts[:, None] * freq_c[None, :], 2.0 * math.pi)
    tab = np.empty((num_tiles, 2, orig_ch), dtype=np.float32)
    tab[:, 0, :] = freq_c.astype(np.float32)
    tab[:, 1, :] = (base + parity[None, :]).astype(np.float32)

    cost = pl.CostEstimate(
        flops=2 * x_len * orig_ch,
        transcendentals=num_tiles * x_tile * orig_ch,
        bytes_accessed=x_len * orig_ch * itemsize + tab.size * 4,
    )

    slab = pl.pallas_call(
        _pe1d_kernel,
        out_shape=jax.ShapeDtypeStruct((x_len, orig_ch), out_dtype),
        grid=(num_tiles,),
        in_specs=[pl.BlockSpec((1, 2, orig_ch), lambda xi: (xi, 0, 0))],
        out_specs=pl.BlockSpec((x_tile, orig_ch), lambda xi: (xi, 0)),
        compiler_params=pltpu.CompilerParams(
            dimension_semantics=("parallel",),
            vmem_limit_bytes=32 * 1024 * 1024),
        cost_estimate=cost,
    )(jnp.asarray(tab))

    # The encoding is batch-invariant: broadcast in the wrapper instead of
    # writing B identical copies from the kernel (B x less HBM write traffic).
    return jnp.broadcast_to(slab[None, :, :], (batch, x_len, orig_ch))


def _reference_numpy(x, org_channels):
    """Pure-numpy port of the PyTorch forward (f32 inv_freq, f64 angles, final cast)."""
    batch, x_len, orig_ch = x.shape
    channels = int(np.ceil(org_channels / 2) * 2)
    inv32 = 1.0 / (np.float32(10000.0) **
                   (np.arange(0, channels, 2, dtype=np.float32) / np.float32(channels)))
    inv_freq = inv32.astype(np.float64)
    pos = np.arange(x_len, dtype=np.float64)
    sin_inp = np.einsum("i,j->ij", pos, inv_freq)
    emb = np.stack([np.sin(sin_inp), np.cos(sin_inp)], axis=-1)
    emb = emb.reshape(x_len, channels).astype(x.dtype)
    return np.broadcast_to(emb[None, :, :orig_ch], (batch, x_len, orig_ch))


if __name__ == "__main__":
    key = jax.random.PRNGKey(0)
    B, X, C = 2, 16, 4
    x = jax.random.normal(key, (B, X, C), dtype=jnp.float32)

    out = positional_encoding_1d(x, org_channels=C)
    out = jax.block_until_ready(out)

    ref = _reference_numpy(np.asarray(x), C)
    np.testing.assert_allclose(np.asarray(out), ref, atol=1e-5, rtol=1e-5)
    print("KERNEL_OK")
</pallas_src>

<mosaic_0001>
module attributes {stable_mosaic.version = 11 : i64} {
  func.func @_pe1d_kernel(%arg0: i32, %arg1: memref<1x2x4xf32, #tpu.memory_space<vmem>>, %arg2: memref<8x4xf32, #tpu.memory_space<vmem>>) attributes {dimension_semantics = [#tpu.dimension_semantics<parallel>], iteration_bounds = array<i64: 2>, scalar_prefetch = 0 : i64, scratch_operands = 0 : i64, tpu.core_type = #tpu.core_type<tc>, window_params = [{transform_indices = @transform_0, window_bounds = array<i64: 1, 2, 4>}, {transform_indices = @transform_1, window_bounds = array<i64: 8, 4>}]} {
    %c0 = arith.constant 0 : index
    %c0_0 = arith.constant 0 : index
    %c0_1 = arith.constant 0 : index
    %0 = vector.load %arg1[%c0, %c0_0, %c0_1] : memref<1x2x4xf32, #tpu.memory_space<vmem>>, vector<1x2x4xf32>
    %1 = vector.extract_strided_slice %0 {offsets = [0, 0, 0], sizes = [1, 1, 4], strides = [1, 1, 1]} : vector<1x2x4xf32> to vector<1x1x4xf32>
    %2 = vector.shape_cast %1 : vector<1x1x4xf32> to vector<1x4xf32>
    %3 = vector.extract_strided_slice %0 {offsets = [0, 1, 0], sizes = [1, 1, 4], strides = [1, 1, 1]} : vector<1x2x4xf32> to vector<1x1x4xf32>
    %4 = vector.shape_cast %3 : vector<1x1x4xf32> to vector<1x4xf32>
    %5 = tpu.iota {dimensions = array<i32: 0>} : vector<8x4xi32>
    %6 = arith.sitofp %5 : vector<8x4xi32> to vector<8x4xf32>
    %7 = vector.broadcast %2 : vector<1x4xf32> to vector<8x4xf32>
    %8 = arith.mulf %6, %7 : vector<8x4xf32>
    %9 = vector.broadcast %4 : vector<1x4xf32> to vector<8x4xf32>
    %10 = arith.addf %8, %9 : vector<8x4xf32>
    %11 = math.sin %10 : vector<8x4xf32>
    %c0_2 = arith.constant 0 : index
    %c0_3 = arith.constant 0 : index
    %12 = vector.load %arg2[%c0_2, %c0_3] : memref<8x4xf32, #tpu.memory_space<vmem>>, vector<8x4xf32>
    tpu.vector_store %arg2[%c0_2, %c0_3], %11 {strides = array<i32>} : memref<8x4xf32, #tpu.memory_space<vmem>>, vector<8x4xf32>,
    return
  }
  func.func @transform_0(%arg0: i32) -> (i32, i32, i32) {
    %c0_i32 = arith.constant 0 : i32
    %c0_i32_0 = arith.constant 0 : i32
    %c0_i32_1 = arith.constant 0 : i32
    return %arg0, %c0_i32, %c0_i32_0 : i32, i32, i32
  }
  func.func @transform_1(%arg0: i32) -> (i32, i32) {
    %c0_i32 = arith.constant 0 : i32
    %c0_i32_0 = arith.constant 0 : i32
    return %arg0, %c0_i32 : i32, i32
  }
}

</mosaic_0001>

<llo_original>
// kernel: tpu_custom_call.1
$region0: #{tpu_custom_call.1}
  #allocation0 [shape = 'u32[]', space=smem, size = 0x4, offset = 0x4, fixed_abs, tag = 'smem constant byte address 0x4 - core index']
  #allocation1 [shape = 'u32[144,128]{1,0:T(1,128)}', space=vmem, size = 0x12000, scoped, tag = 'internal scratch']
  %s0 = inlined_call_operand.hbm [shape: f32[2,2,4], index: 0, kind: input, shape index: {}]
  %s1 = inlined_call_operand.vmem [shape: f32[16,4], index: 1, kind: output, shape index: {}]
  %s2 = sld [smem:[#allocation0]]
  $region41: #{tpu_custom_call.1} parent=0
    _
  %s4 = ssub.s32 1, %s2
  %s5 = scalar_select 0, %s4, %s2
  $region1: #{tpu_custom_call.1} parent=0
    #allocation2 [shape = 'u8[2048]{0}', space=vmem, size = 0x800, scoped, tag = 'input window, operand 0']
    #allocation3 [shape = 's32[2]{0}', space=sflag, size = 0x8, scoped, tag = 'scoped memory for tpu_custom_call.1']
    %6 = vsyncpa [#allocation3], 0
    %s7 = scalar_lea.sflag [#allocation3], 1
    %8 = vsyncpa %s7, 0
    loop: start=0, step=1, limit=4
    $region2: #{tpu_custom_call.1} parent=1 // loop_pre_header
      _
    $region3: #{tpu_custom_call.1} parent=1 // loop_header
      %s10 = sphi 0, %s14
      %p11 = scmp.ge.s32.totalorder %s10, 4
      %s20 = sphi 0, %s22
      %s23 = sphi 0, %s20
      %s24 = sphi 0, %s23
      %s40 = sphi 0, %s24
      %s46 = sphi 0, %s48
      %s49 = sphi 0, %s46
      %s50 = sphi 0, %s49
      %s66 = sphi 0, %s50
    $region4: #{tpu_custom_call.1} parent=1 // loop_header_branch
      %13 = sbr.rel (%p11) target = $region8
    $region5: #{tpu_custom_call.1} parent=1 // loop_body
      %s15 = ssub.s32 %s10, 1
      %s16 = ssub.s32 %s10, 2
      %s17 = sadd.s32 %s10, 1
      %s18 = ssub.s32 %s10, %s17
      %p19 = scmp.eq.s32.totalorder %s18, 0
      %s21 = sadd.s32 %s20, 1
      %s22 = scalar_select %p19, %s20, %s21
      %p25 = pneg %p19
      %p26 = scmp.eq.s32.totalorder %s10, 1
      %p27 = por %p25, %p26
      %p28 = scmp.ne.s32.totalorder %s20, %s23
      %p29 = scmp.eq.s32.totalorder %s10, 0
      %p30 = por %p28, %p29
      %p31 = scmp.ne.s32.totalorder %s20, %s23
      %p32 = scmp.eq.s32.totalorder %s15, 1
      %p33 = por %p31, %p32
      %p34 = scmp.ne.s32.totalorder %s23, %s24
      %p35 = scmp.eq.s32.totalorder %s15, 0
      %p36 = por %p34, %p35
      %p37 = scmp.ne.s32.totalorder %s23, %s24
      %p38 = scmp.eq.s32.totalorder %s16, 1
      %p39 = por %p37, %p38
      %p41 = scmp.ne.s32.totalorder %s24, %s40
      %p42 = scmp.eq.s32.totalorder %s16, 0
      %p43 = por %p41, %p42
      %s44 = ssub.s32 %s10, %s17
      %p45 = scmp.eq.s32.totalorder %s44, 0
      %s47 = sadd.s32 %s46, 1
      %s48 = scalar_select %p45, %s46, %s47
      %p51 = pneg %p45
      %p52 = scmp.eq.s32.totalorder %s10, 1
      %p53 = por %p51, %p52
      %p54 = scmp.ne.s32.totalorder %s46, %s49
      %p55 = scmp.eq.s32.totalorder %s10, 0
      %p56 = por %p54, %p55
      %p57 = scmp.ne.s32.totalorder %s46, %s49
      %p58 = scmp.eq.s32.totalorder %s15, 1
      %p59 = por %p57, %p58
      %p60 = scmp.ne.s32.totalorder %s49, %s50
      %p61 = scmp.eq.s32.totalorder %s15, 0
      %p62 = por %p60, %p61
      %p63 = scmp.ne.s32.totalorder %s49, %s50
      %p64 = scmp.eq.s32.totalorder %s16, 1
      %p65 = por %p63, %p64
      %p67 = scmp.ne.s32.totalorder %s50, %s66
      %p68 = scmp.eq.s32.totalorder %s16, 0
      %p69 = por %p67, %p68
      %p70 = scmp.le.s32.totalorder 1, %s10
      %p71 = scmp.lt.s32.totalorder %s10, 3
      %p72 = pnand %p70, %p71
      %p73 = pneg %p72
      // Predicated region
      $region9: #{tpu_custom_call.1} parent=5 // pred_check
        _
      $region10: #{tpu_custom_call.1} parent=5 // pred_check_branch
        %75 = sbr.rel (%p72) target = $region12
      $region11: #{tpu_custom_call.1} parent=5 // pred_region
        %s76 = ssub.s32 %s10, 1
      $region12: #{tpu_custom_call.1} parent=5 // pred_fallthru
        _
      %p77 = scmp.lt.s32.totalorder %s10, 2
      // Predicated region
      $region13: #{tpu_custom_call.1} parent=5 // pred_check
        %p78 = pneg %p77
      $region14: #{tpu_custom_call.1} parent=5 // pred_check_branch
        %80 = sbr.rel (%p78) target = $region16
      $region15: #{tpu_custom_call.1} parent=5 // pred_region
        // Predicated region
        $region17: #{tpu_custom_call.1} parent=15 // pred_check
          %p81 = pneg %p30
        $region18: #{tpu_custom_call.1} parent=15 // pred_check_branch
          %83 = sbr.rel (%p81) target = $region20
        $region19: #{tpu_custom_call.1} parent=15 // pred_region
          %s84 = sand.u32 %s20, 1
          %s85 = scalar_lea.sflag [#allocation3], %s84
          %s86 = sand.u32 %s20, 1
          %s87 = smul.addr %s86, 2
          %s88 = scalar_lea.vmem [#allocation2], %s87
          %s90 = ssub.s32 32, 32
          %91 = vsyncadd %s85, %s90
          %s92 = smul.addr %s10, 32
          %s93 = scalar_lea.hbm %s0, %s92
          %s95 = sshll.u32 %s88, 4
          %s96 = int_to_ptr.vmem [resolvable:$true] %s95
          %98 = dma.hbm_to_vmem [thread:$0]  %s93, 32, %s96, %s85
        $region20: #{tpu_custom_call.1} parent=15 // pred_fallthru
          _
      $region16: #{tpu_custom_call.1} parent=5 // pred_fallthru
        _
      %p99 = scmp.le.s32.totalorder 1, %s10
      %p100 = scmp.lt.s32.totalorder %s10, 3
      %p101 = pnand %p99, %p100
      %p102 = pneg %p101
      // Predicated region
      $region21: #{tpu_custom_call.1} parent=5 // pred_check
        _
      $region22: #{tpu_custom_call.1} parent=5 // pred_check_branch
        %104 = sbr.rel (%p101) target = $region24
      $region23: #{tpu_custom_call.1} parent=5 // pred_region
        %s105 = ssub.s32 %s10, 1
        %s106 = sand.u32 %s23, 1
        %s107 = scalar_lea.sflag [#allocation3], %s106
        %s108 = sand.u32 %s23, 1
        %s109 = smul.addr %s108, 2
        %s110 = scalar_lea.vmem [#allocation2], %s109
        // Predicated region
        $region25: #{tpu_custom_call.1} parent=23 // pred_check
          %p111 = pneg %p36
        $region26: #{tpu_custom_call.1} parent=23 // pred_check_branch
          %113 = sbr.rel (%p111) target = $region28
        $region27: #{tpu_custom_call.1} parent=23 // pred_region
          %114 = dma.done %s107, 32
        $region28: #{tpu_custom_call.1} parent=23 // pred_fallthru
          _
        %s115 = sand.u32 %s23, 1
        %s116 = scalar_lea.sflag [#allocation3], %s115
        %s117 = sand.u32 %s23, 1
        %s118 = smul.addr %s117, 2
        %s119 = scalar_lea.vmem [#allocation2], %s118
        %p120 = pneg %p36
        %p121 = pneg %p33
        %p122 = pneg %p62
        %p123 = pneg %p59
        %p124 = scmp.lt.s32.totalorder %s15, 1
        %s125 = scalar_select %p124, %s15, 1
        %s126 = smul.addr %s125, 8
        %s127 = scalar_lea.vmem %s1, %s126
        %p128 = scmp.lt.s32.totalorder %s15, 1
        %s129 = scalar_select %p128, %s15, 1
        %s130 = smul.addr %s129, 8
        %s131 = scalar_lea.vmem %s1, %s130
        %v132 = vld [vmem:[%s110] sm:$0x3]
        %v133 = vlaneseq
        %v134 = vshrl.u32 %v133, 7
        %v135 = vcvt.s32.f32 %v134
        %v136 = vlaneseq
        %v137 = vshrl.u32 %v136, 7
        %v138 = vsub.s32 0, %v137
        %v139 = vrot.slane %v132, %v138
        %v140 = vmul.f32 %v135, %v139
        %v141 = vlaneseq
        %v142 = vshrl.u32 %v141, 7
        %v143 = vsub.s32 1, %v142
        %v144 = vrot.slane %v132, %v143
        %v145 = vadd.f32 %v140, %v144
        %v146 = vand.u32 2147483647, %v145
        %vm147 = vcmp.le.f32.partialorder %v146, 0.7853982
        %vm148 = vcmp.lt.s32.totalorder %v145, 0
        %v149 = vand.u32 %v145, 2139095040
        %v150 = vshrl.u32 %v149, 23
        %v151 = vsub.s32 %v150, 127
        %v152 = vand.u32 2147483647, %v145
        %v153 = vand.u32 %v152, 8388607
        %v154 = vor.u32 %v153, 8388608
        %v155 = vsub.s32 0, %v154
        %v156 = vadd.s32 %v151, 1
        %vm157 = vcmp.gt.s32.totalorder %v156, 0
        %v158 = vsel %vm157, %v156, 0
        %v159 = vshrl.u32 %v158, 5
        %v160 = vand.u32 %v158, 31
        %v161 = vsub.s32 32, %v160
        %v162 = vshrl.u32 683565275, %v161
        %v163 = vshll.u32 683565275, %v160
        %v164 = vshrl.u32 2475754826, %v161
        %v165 = vor.u32 %v163, %v164
        %v166 = vshll.u32 2475754826, %v160
        %v167 = vshrl.u32 2131351028, %v161
        %v168 = vor.u32 %v166, %v167
        %v169 = vshll.u32 2131351028, %v160
        %v170 = vshrl.u32 2102212464, %v161
        %v171 = vor.u32 %v169, %v170
        %v172 = vshll.u32 2102212464, %v160
        %v173 = vshrl.u32 920167782, %v161
        %v174 = vor.u32 %v172, %v173
        %v175 = vshll.u32 920167782, %v160
        %v176 = vshrl.u32 1326507024, %v161
        %v177 = vor.u32 %v175, %v176
        %vm178 = vcmp.lt.s32.totalorder %v159, 1
        %vm179 = vcmp.lt.s32.totalorder %v159, 2
        %vm180 = vcmp.lt.s32.totalorder %v159, 3
        %vm181 = vcmp.lt.s32.totalorder %v159, 4
        %v182 = vsel %vm178, %v162, %v165
        %v183 = vsel %vm181, %v171, 2102212464
        %v184 = vsel %vm180, %v168, %v183
        %v185 = vsel %vm179, %v182, %v184
        %v186 = vsel %vm178, %v165, %v168
        %v187 = vsel %vm181, %v174, 920167782
        %v188 = vsel %vm180, %v171, %v187
        %v189 = vsel %vm179, %v186, %v188
        %v190 = vsel %vm178, %v168, %v171
        %v191 = vsel %vm181, %v177, 1326507024
        %v192 = vsel %vm180, %v174, %v191
        %v193 = vsel %vm179, %v190, %v192
        %v194 = vshll.u32 %v154, 8
        %v195 = vmul.u32.u64.compose %v194, %v193
        %v196 = vextract.low.u32 %v195
        %v197 = vextract.high.u32 %v195
        %v198 = vmul.u32.u64.compose %v194, %v189
        %v199 = vextract.low.u32 %v198
        %v200 = vextract.high.u32 %v198
        %v201 = vmul.u32 %v194, %v185
        %v202 = vadd.s32 %v197, %v199
        %vm203 = vc.u32 %v197, %v199
        %v204 = vadd.s32 %v200, 1
        %v205 = vsel %vm203, %v204, %v200
        %v206 = vadd.s32 %v201, %v205
        %v207 = vadd.s32 %v206, 536870912
        %v208 = vshrl.u32 %v207, 30
        %v209 = vshll.u32 %v208, 30
        %v210 = vsub.s32 %v206, %v209
        %vm211 = vcmp.lt.s32.totalorder %v210, 0
        %v212 = vsub.s32 0, %v210
        %v213 = vsel %vm211, %v212, %v210
        %v214 = vclz %v213
        %v215 = vsub.s32 %v214, 2
        %vm216 = vcmp.gt.s32.totalorder 0, %v215
        %v217 = vsel %vm216, 0, %v215
        %v218 = vsub.s32 32, %v217
        %v219 = vshll.u32 %v210, %v217
        %v220 = vshrl.u32 %v202, %v218
        %v221 = vor.u32 %v219, %v220
        %v222 = vsub.s32 4294967266, %v217
        %v223 = vadd.s32 %v222, 127
        %v224 = vshll.u32 %v223, 23
        %v225 = vor.u32 4788187, %v224
        %v226 = vand.u32 2147483647, %v225
        %v228 = vcvt.s32.f32 %v221
        %v229 = vmul.f32 %v228, %v226
        %v230 = vxor.u32 %v229, 2147483648
        %v231 = vsel %vm148, %v230, %v229
        %v232 = vsub.s32 4, %v208
        %v233 = vsel %vm148, %v232, %v208
        %v234 = vsel %vm147, %v145, %v231
        %v235 = vsel %vm147, 0, %v233
        %v236 = vcosq.f32.pop %v234
        %v237 = vsinq.f32.pop %v234
        %vm238 = vweird.f32 %v145
        %v239 = vadd.s32 %v235, 3
        %v240 = vand.u32 %v239, 3
        %vm241 = vcmp.lt.s32.totalorder %v240, 2
        %vm242 = vcmp.eq.s32.totalorder %v240, 0
        %v243 = vxor.u32 %v237, 2147483648
        %v244 = vsel %vm242, %v236, %v243
        %vm245 = vcmp.eq.s32.totalorder %v240, 2
        %v246 = vxor.u32 %v236, 2147483648
        %v247 = vsel %vm245, %v246, %v237
        %v248 = vsel %vm241, %v244, %v247
        %v249 = vsel %vm238, nan, %v248
        %vm250 = vcmask 31744
        %251 = vst.msk [vmem:[%s131] sm:$0xff] %vm250, %v249
        %p252 = scmp.lt.s32.totalorder %s15, 1
        %s253 = scalar_select %p252, %s15, 1
        %s254 = smul.addr %s253, 8
        %s255 = scalar_lea.vmem %s1, %s254
        // Predicated region
        $region29: #{tpu_custom_call.1} parent=23 // pred_check
          %p256 = pneg %p59
        $region30: #{tpu_custom_call.1} parent=23 // pred_check_branch
          %258 = sbr.rel (%p256) target = $region32
        $region31: #{tpu_custom_call.1} parent=23 // pred_region
          _
        $region32: #{tpu_custom_call.1} parent=23 // pred_fallthru
          _
      $region24: #{tpu_custom_call.1} parent=5 // pred_fallthru
        _
      %p259 = scmp.le.s32.totalorder 2, %s10
      // Predicated region
      $region33: #{tpu_custom_call.1} parent=5 // pred_check
        %p260 = pneg %p259
      $region34: #{tpu_custom_call.1} parent=5 // pred_check_branch
        %262 = sbr.rel (%p260) target = $region36
      $region35: #{tpu_custom_call.1} parent=5 // pred_region
        %s263 = ssub.s32 %s10, 2
        // Predicated region
        $region37: #{tpu_custom_call.1} parent=35 // pred_check
          %p264 = pneg %p65
        $region38: #{tpu_custom_call.1} parent=35 // pred_check_branch
          %266 = sbr.rel (%p264) target = $region40
        $region39: #{tpu_custom_call.1} parent=35 // pred_region
          %p267 = scmp.lt.s32.totalorder %s16, 1
          %s268 = scalar_select %p267, %s16, 1
          %s269 = smul.addr %s268, 8
          %s270 = scalar_lea.vmem %s1, %s269
        $region40: #{tpu_custom_call.1} parent=35 // pred_fallthru
          _
      $region36: #{tpu_custom_call.1} parent=5 // pred_fallthru
        _
    $region6: #{tpu_custom_call.1} parent=1 // loop_footer
      %s14 = sadd.s32 1, %s10
    $region7: #{tpu_custom_call.1} parent=1 // loop_footer_branch
      %9 = sbr.rel target = $region3
    $region8: #{tpu_custom_call.1} parent=1 // loop_exit
      _
    %271 = vsyncpa [#allocation3], 1
    %s272 = scalar_lea.sflag [#allocation3], 1
    %273 = vsyncpa %s272, 1

</llo_original>
